<compile_context>
chip_gen: v7x
topology: tpu7x:2x2x1
jax: 0.10.0
libtpu: 0.0.40
codegen_flags: <defaults>
</compile_context>

<pallas_src>
import functools

import jax
import jax.numpy as jnp
from jax.experimental import pallas as pl
from jax.experimental.pallas import tpu as pltpu

_EPS = 1e-5                       # PyTorch default for BatchNorm2d / InstanceNorm2d
_LANE = 128
_BLOCK_BYTES = 4 * 1024 * 1024    # ~4 MiB per data block (in/out double-buffered
                                  # => ~16 MiB peak; fits every generation)
_VMEM_LIMIT = 48 * 1024 * 1024    # scoped-VMEM limit; < v7x 64 MiB physical


def _round_up(x, m):
    return ((x + m - 1) // m) * m


def _sublane(itemsize):
    # f32 -> 8, bf16/f16 -> 16, int8/fp8 -> 32 (packed-sublane granularity).
    return max(8, 32 // int(itemsize))


def _pick_tiles(R, L, itemsize):
    """Choose (TR, TL) for the (R, L) row matrix. No geometric padding:
    grids use cdiv and ragged tails are masked/dropped in-kernel."""
    sub = _sublane(itemsize)
    budget = max(_BLOCK_BYTES // int(itemsize), sub * _LANE)   # elems / block
    # Lane tile: take the whole row if it fits with >= `sub` rows per block
    # (block dim == full array dim satisfies the (8,128) rule -> no masking).
    if L * sub <= budget:
        TL = L
    else:
        TL = max(_LANE, (budget // sub) // _LANE * _LANE)      # multiple of 128
    # Row tile.
    max_rows = max(sub, (budget // TL) // sub * sub)
    if R < sub:
        TR = R                              # full dim -> single (valid) block
    elif R <= max_rows:
        # Everything would fit one block; keep >= 2 row blocks when R allows so
        # both v7x TensorCores get work on the 'parallel' axis.
        TR = _round_up(-(-R // 2), sub) if R >= 2 * sub else sub
        TR = min(TR, max_rows)
    else:
        TR = max_rows
    return TR, TL


# ------------------- fused single-pass InstanceNorm kernel -------------------
# Whole (H*W) row lives in one block: 1 HBM read + 1 HBM write, stats computed
# in VMEM with mean-centered variance (numerically stable).

def _fused_in_kernel(x_ref, g_ref, b_ref, o_ref, *, inv_count):
    x = x_ref[...].astype(jnp.float32)
    mean = jnp.sum(x, axis=-1, keepdims=True) * inv_count
    xc = x - mean
    var = jnp.sum(xc * xc, axis=-1, keepdims=True) * inv_count   # biased, centered
    scale = jax.lax.rsqrt(var + _EPS) * g_ref[...]
    o_ref[...] = (xc * scale + b_ref[...]).astype(o_ref.dtype)


def _fused_in(x2d, g_rows, b_rows, TR, out_dtype):
    R, L = x2d.shape
    kern = functools.partial(_fused_in_kernel, inv_count=1.0 / float(L))
    return pl.pallas_call(
        kern,
        out_shape=jax.ShapeDtypeStruct((R, L), out_dtype),
        grid=(pl.cdiv(R, TR),),
        in_specs=[
            pl.BlockSpec((TR, L), lambda i: (i, 0)),
            pl.BlockSpec((TR, 1), lambda i: (i, 0)),
            pl.BlockSpec((TR, 1), lambda i: (i, 0)),
        ],
        out_specs=pl.BlockSpec((TR, L), lambda i: (i, 0)),
        compiler_params=pltpu.CompilerParams(
            dimension_semantics=("parallel",),
            vmem_limit_bytes=_VMEM_LIMIT),
    )(x2d, g_rows, b_rows)


# --------------------------- two-stage path ----------------------------------
# Stage 1: per-row sum / sumsq, reduction over the (last, 'arbitrary') L axis.
# Ragged tail lane-tiles are masked in-kernel (only when a row is split across
# lane tiles); ragged row-tiles need no masking (OOB output rows are dropped).
# TODO(synk): for extremely large counts / far-from-zero means, switch the
# two-stage stats to per-tile mean-centered partials + Chan's combine.

def _stats_kernel(x_ref, sum_ref, ssq_ref, *, L, TL, need_mask):
    @pl.when(pl.program_id(1) == 0)
    def _():
        sum_ref[...] = jnp.zeros_like(sum_ref)
        ssq_ref[...] = jnp.zeros_like(ssq_ref)

    x = x_ref[...].astype(jnp.float32)
    if need_mask:
        col = (jax.lax.broadcasted_iota(jnp.int32, x.shape, 1)
               + pl.program_id(1) * TL)
        x = jnp.where(col < L, x, 0.0)
    sum_ref[...] += jnp.sum(x, axis=-1, keepdims=True)
    ssq_ref[...] += jnp.sum(x * x, axis=-1, keepdims=True)


def _row_stats(x2d, TR, TL):
    R, L = x2d.shape
    kern = functools.partial(_stats_kernel, L=L, TL=TL, need_mask=(L % TL != 0))
    return pl.pallas_call(
        kern,
        out_shape=(jax.ShapeDtypeStruct((R, 1), jnp.float32),
                   jax.ShapeDtypeStruct((R, 1), jnp.float32)),
        grid=(pl.cdiv(R, TR), pl.cdiv(L, TL)),
        in_specs=[pl.BlockSpec((TR, TL), lambda i, j: (i, j))],
        out_specs=(pl.BlockSpec((TR, 1), lambda i, j: (i, 0)),
                   pl.BlockSpec((TR, 1), lambda i, j: (i, 0))),
        compiler_params=pltpu.CompilerParams(
            dimension_semantics=("parallel", "arbitrary"),
            vmem_limit_bytes=_VMEM_LIMIT),
    )(x2d)


# Stage 2: y = x * scale_row + shift_row (scale/shift pre-folded in wrapper).

def _apply_kernel(x_ref, sc_ref, sh_ref, o_ref):
    o_ref[...] = (x_ref[...].astype(jnp.float32) * sc_ref[...]
                  + sh_ref[...]).astype(o_ref.dtype)


def _row_apply(x2d, sc_rows, sh_rows, TR, TL, out_dtype):
    R, L = x2d.shape
    return pl.pallas_call(
        _apply_kernel,
        out_shape=jax.ShapeDtypeStruct((R, L), out_dtype),
        grid=(pl.cdiv(R, TR), pl.cdiv(L, TL)),
        in_specs=[
            pl.BlockSpec((TR, TL), lambda i, j: (i, j)),
            pl.BlockSpec((TR, 1), lambda i, j: (i, 0)),
            pl.BlockSpec((TR, 1), lambda i, j: (i, 0)),
        ],
        out_specs=pl.BlockSpec((TR, TL), lambda i, j: (i, j)),
        compiler_params=pltpu.CompilerParams(
            dimension_semantics=("parallel", "parallel"),
            vmem_limit_bytes=_VMEM_LIMIT),
    )(x2d, sc_rows, sh_rows)


# --------------------------- module wrapper ----------------------------------

class NormLayer:
    """JAX/Pallas port of the PyTorch NormLayer module (forward only)."""

    def __init__(self, channels, normalize_shape=None, norm_type='bn'):
        norm_type = norm_type.lower()
        self.norm_type = norm_type
        self.channels = channels
        if norm_type in ('bn', 'in'):
            # PyTorch default affine is ones/zeros; use varied values so the
            # affine path is actually exercised.
            self.gamma = 1.0 + 0.1 * jnp.arange(channels, dtype=jnp.float32)
            self.beta = 0.05 * jnp.arange(channels, dtype=jnp.float32)
        elif norm_type == 'none':
            pass
        else:
            raise AssertionError('Norm type {} not support.'.format(norm_type))

    def __call__(self, x):
        if self.norm_type == 'none':
            return x  # identity

        N, C, H, W = x.shape
        assert C == self.channels
        R, L = N * C, H * W

        x2d = x.reshape(R, L)                       # copy-free view
        TR, TL = _pick_tiles(R, L, jnp.dtype(x.dtype).itemsize)

        gamma_rows = jnp.tile(self.gamma, (N,)).reshape(R, 1)   # tiny, per-row c
        beta_rows = jnp.tile(self.beta, (N,)).reshape(R, 1)

        if self.norm_type == 'in' and TL == L:
            # Whole spatial row fits one block: single pass, 1 read + 1 write.
            y2d = _fused_in(x2d, gamma_rows, beta_rows, TR, x.dtype)
            return y2d.reshape(N, C, H, W)

        # Two-stage path (BN always; IN only when a row exceeds one block).
        sums, ssqs = _row_stats(x2d, TR, TL)
        sums = sums[:, 0]
        ssqs = ssqs[:, 0]

        if self.norm_type == 'bn':
            cnt = float(N * L)                      # stats over (N, H, W)
            mean = sums.reshape(N, C).sum(axis=0) / cnt
            ex2 = ssqs.reshape(N, C).sum(axis=0) / cnt
            var = jnp.maximum(ex2 - mean * mean, 0.0)
            scale_c = self.gamma * jax.lax.rsqrt(var + _EPS)
            shift_c = self.beta - mean * scale_c
            scale_rows = jnp.tile(scale_c, (N,)).reshape(R, 1)
            shift_rows = jnp.tile(shift_c, (N,)).reshape(R, 1)
        else:  # 'in' with very long rows
            cnt = float(L)                          # stats over (H, W)
            mean = sums / cnt
            var = jnp.maximum(ssqs / cnt - mean * mean, 0.0)
            scale_r = gamma_rows[:, 0] * jax.lax.rsqrt(var + _EPS)
            scale_rows = scale_r.reshape(R, 1)
            shift_rows = (beta_rows[:, 0] - mean * scale_r).reshape(R, 1)

        y2d = _row_apply(x2d, scale_rows, shift_rows, TR, TL, x.dtype)
        return y2d.reshape(N, C, H, W)

    # TODO(synk): nn.BatchNorm2d running_mean/running_var buffer updates
    # (training-mode side effect) and eval-mode normalization using running
    # stats are not modeled; training-mode forward output is unaffected.


# ----------------------------- reference (pure jnp) ---------------------------

def _bn_ref(x, gamma, beta):
    mean = x.mean(axis=(0, 2, 3), keepdims=True)
    var = x.var(axis=(0, 2, 3), keepdims=True)  # biased
    xn = (x - mean) / jnp.sqrt(var + _EPS)
    return xn * gamma.reshape(1, -1, 1, 1) + beta.reshape(1, -1, 1, 1)


def _in_ref(x, gamma, beta):
    mean = x.mean(axis=(2, 3), keepdims=True)
    var = x.var(axis=(2, 3), keepdims=True)  # biased
    xn = (x - mean) / jnp.sqrt(var + _EPS)
    return xn * gamma.reshape(1, -1, 1, 1) + beta.reshape(1, -1, 1, 1)


if __name__ == "__main__":
    key = jax.random.PRNGKey(0)
    k1, k2, k3 = jax.random.split(key, 3)

    # Aligned shapes: (2, 4, 16, 16) -> rows=8, cols=256.
    N, C, H, W = 2, 4, 16, 16
    x = jax.random.normal(k1, (N, C, H, W), dtype=jnp.float32) * 2.0 + 0.5

    bn_layer = NormLayer(C, norm_type='bn')
    y_bn = jax.block_until_ready(bn_layer(x))
    assert y_bn.shape == x.shape and y_bn.dtype == x.dtype
    assert jnp.allclose(y_bn, _bn_ref(x, bn_layer.gamma, bn_layer.beta),
                        atol=1e-4, rtol=1e-4)

    in_layer = NormLayer(C, norm_type='in')
    y_in = jax.block_until_ready(in_layer(x))
    assert y_in.shape == x.shape and y_in.dtype == x.dtype
    assert jnp.allclose(y_in, _in_ref(x, in_layer.gamma, in_layer.beta),
                        atol=1e-4, rtol=1e-4)

    none_layer = NormLayer(C, norm_type='none')
    assert jnp.array_equal(jax.block_until_ready(none_layer(x)), x)

    # Unaligned shapes: rows=15 (not a multiple of 8), cols=49 (not 128-aligned)
    # -> exercises ragged row blocks and full-dim (non-128) lane blocks, with
    #    zero pad/slice copies.
    N2, C2, H2, W2 = 3, 5, 7, 7
    x2 = jax.random.normal(k2, (N2, C2, H2, W2), dtype=jnp.float32) * 3.0 - 1.0
    bn2 = NormLayer(C2, norm_type='bn')
    y2 = jax.block_until_ready(bn2(x2))
    assert jnp.allclose(y2, _bn_ref(x2, bn2.gamma, bn2.beta),
                        atol=1e-4, rtol=1e-4)
    in2 = NormLayer(C2, norm_type='in')
    y2i = jax.block_until_ready(in2(x2))
    assert jnp.allclose(y2i, _in_ref(x2, in2.gamma, in2.beta),
                        atol=1e-4, rtol=1e-4)

    # Direct stats-kernel check with a forced sub-row lane tile (L=200, TL=128)
    # to exercise the ragged-tail column-masking path.
    xs = jax.random.normal(k3, (8, 200), dtype=jnp.float32)
    s, ss = _row_stats(xs, 8, 128)
    s = jax.block_until_ready(s)
    assert jnp.allclose(s[:, 0], xs.sum(-1), atol=1e-3, rtol=1e-4)
    assert jnp.allclose(ss[:, 0], (xs * xs).sum(-1), atol=1e-3, rtol=1e-4)

    print("KERNEL_OK")
</pallas_src>

<mosaic_0001>
module attributes {stable_mosaic.version = 11 : i64} {
  func.func @_stats_kernel(%arg0: i32, %arg1: i32, %arg2: memref<8x256xf32, #tpu.memory_space<vmem>>, %arg3: memref<8x1xf32, #tpu.memory_space<vmem>>, %arg4: memref<8x1xf32, #tpu.memory_space<vmem>>) attributes {dimension_semantics = [#tpu.dimension_semantics<parallel>, #tpu.dimension_semantics<arbitrary>], iteration_bounds = array<i64: 1, 1>, scalar_prefetch = 0 : i64, scratch_operands = 0 : i64, tpu.core_type = #tpu.core_type<tc>, window_params = [{transform_indices = @transform_0, window_bounds = array<i64: 8, 256>}, {transform_indices = @transform_1, window_bounds = array<i64: 8, 1>}, {transform_indices = @transform_2, window_bounds = array<i64: 8, 1>}]} {
    %c0_i32 = arith.constant 0 : i32
    %0 = arith.cmpi eq, %arg1, %c0_i32 : i32
    %1 = arith.extui %0 : i1 to i32
    %c0_i32_0 = arith.constant 0 : i32
    %2 = arith.cmpi ne, %1, %c0_i32_0 : i32
    scf.if %2 {
      %cst_11 = arith.constant 0.000000e+00 : f32
      %15 = vector.broadcast %cst_11 : f32 to vector<8x1xf32>
      %c0_12 = arith.constant 0 : index
      %c0_13 = arith.constant 0 : index
      %16 = vector.load %arg3[%c0_12, %c0_13] : memref<8x1xf32, #tpu.memory_space<vmem>>, vector<8x1xf32>
      tpu.vector_store %arg3[%c0_12, %c0_13], %15 {strides = array<i32>} : memref<8x1xf32, #tpu.memory_space<vmem>>, vector<8x1xf32>,
      %cst_14 = arith.constant 0.000000e+00 : f32
      %17 = vector.broadcast %cst_14 : f32 to vector<8x1xf32>
      %c0_15 = arith.constant 0 : index
      %c0_16 = arith.constant 0 : index
      %18 = vector.load %arg4[%c0_15, %c0_16] : memref<8x1xf32, #tpu.memory_space<vmem>>, vector<8x1xf32>
      tpu.vector_store %arg4[%c0_15, %c0_16], %17 {strides = array<i32>} : memref<8x1xf32, #tpu.memory_space<vmem>>, vector<8x1xf32>,
    } else {
    }
    %c0 = arith.constant 0 : index
    %c0_1 = arith.constant 0 : index
    %3 = vector.load %arg2[%c0, %c0_1] : memref<8x256xf32, #tpu.memory_space<vmem>>, vector<8x256xf32>
    %c0_2 = arith.constant 0 : index
    %c0_3 = arith.constant 0 : index
    %4 = vector.load %arg3[%c0_2, %c0_3] : memref<8x1xf32, #tpu.memory_space<vmem>>, vector<8x1xf32>
    %cst = arith.constant dense<0.000000e+00> : vector<8xf32>
    %5 = vector.multi_reduction <add>, %3, %cst [1] : vector<8x256xf32> to vector<8xf32>
    %6 = vector.shape_cast %5 : vector<8xf32> to vector<8x1xf32>
    %7 = arith.addf %4, %6 : vector<8x1xf32>
    %c0_4 = arith.constant 0 : index
    %c0_5 = arith.constant 0 : index
    %8 = vector.load %arg3[%c0_4, %c0_5] : memref<8x1xf32, #tpu.memory_space<vmem>>, vector<8x1xf32>
    tpu.vector_store %arg3[%c0_4, %c0_5], %7 {strides = array<i32>} : memref<8x1xf32, #tpu.memory_space<vmem>>, vector<8x1xf32>,
    %c0_6 = arith.constant 0 : index
    %c0_7 = arith.constant 0 : index
    %9 = vector.load %arg4[%c0_6, %c0_7] : memref<8x1xf32, #tpu.memory_space<vmem>>, vector<8x1xf32>
    %10 = arith.mulf %3, %3 : vector<8x256xf32>
    %cst_8 = arith.constant dense<0.000000e+00> : vector<8xf32>
    %11 = vector.multi_reduction <add>, %10, %cst_8 [1] : vector<8x256xf32> to vector<8xf32>
    %12 = vector.shape_cast %11 : vector<8xf32> to vector<8x1xf32>
    %13 = arith.addf %9, %12 : vector<8x1xf32>
    %c0_9 = arith.constant 0 : index
    %c0_10 = arith.constant 0 : index
    %14 = vector.load %arg4[%c0_9, %c0_10] : memref<8x1xf32, #tpu.memory_space<vmem>>, vector<8x1xf32>
    tpu.vector_store %arg4[%c0_9, %c0_10], %13 {strides = array<i32>} : memref<8x1xf32, #tpu.memory_space<vmem>>, vector<8x1xf32>,
    return
  }
  func.func @transform_0(%arg0: i32, %arg1: i32) -> (i32, i32) {
    %c0_i32 = arith.constant 0 : i32
    return %arg0, %arg1 : i32, i32
  }
  func.func @transform_1(%arg0: i32, %arg1: i32) -> (i32, i32) {
    %c0_i32 = arith.constant 0 : i32
    %c0_i32_0 = arith.constant 0 : i32
    return %arg0, %c0_i32 : i32, i32
  }
  func.func @transform_2(%arg0: i32, %arg1: i32) -> (i32, i32) {
    %c0_i32 = arith.constant 0 : i32
    %c0_i32_0 = arith.constant 0 : i32
    return %arg0, %c0_i32 : i32, i32
  }
}

</mosaic_0001>

<llo_original>
// kernel: tpu_custom_call.1
$region0: #{tpu_custom_call.1}
  #allocation0 [shape = 'u32[]', space=smem, size = 0x4, offset = 0x4, fixed_abs, tag = 'smem constant byte address 0x4 - core index']
  #allocation1 [shape = 'u32[144,128]{1,0:T(1,128)}', space=vmem, size = 0x12000, scoped, tag = 'internal scratch']
  %s0 = inlined_call_operand.hbm [shape: f32[8,256], index: 0, kind: input, shape index: {}]
  %s1 = inlined_call_operand.vmem [shape: f32[8,1], index: 1, kind: output, shape index: {0}]
  %s2 = inlined_call_operand.vmem [shape: f32[8,1], index: 2, kind: output, shape index: {1}]
  %3 = xla_tuple %s1, %s2
  %s4 = sld [smem:[#allocation0]]
  $region30: #{tpu_custom_call.1} parent=0
    _
  %s6 = ssub.s32 1, %s4
  %s7 = scalar_select 0, %s6, %s4
  $region1: #{tpu_custom_call.1} parent=0
    #allocation2 [shape = 'u8[8192]{0}', space=vmem, size = 0x2000, scoped, tag = 'input window, operand 0, single buffered']
    #allocation3 [shape = 's32[1]{0}', space=sflag, size = 0x4, scoped, tag = 'scoped memory for tpu_custom_call.1']
    %8 = vsyncpa [#allocation3], 0
    // Predicated region
    $region2: #{tpu_custom_call.1} parent=1 // pred_check
      _
    $region3: #{tpu_custom_call.1} parent=1 // pred_check_branch
      %10 = sbr.rel (0) target = $region5
    $region4: #{tpu_custom_call.1} parent=1 // pred_region
      %s12 = ssub.s32 256, 256
      %13 = vsyncadd [#allocation3], %s12
      %s15 = sshll.u32 [#allocation2], 4
      %s16 = int_to_ptr.vmem [resolvable:$true] %s15
      %18 = dma.hbm_to_vmem [thread:$0]  %s0, 256, %s16, [#allocation3]
    $region5: #{tpu_custom_call.1} parent=1 // pred_fallthru
      _
    // Predicated region
    $region6: #{tpu_custom_call.1} parent=1 // pred_check
      _
    $region7: #{tpu_custom_call.1} parent=1 // pred_check_branch
      %20 = sbr.rel (0) target = $region9
    $region8: #{tpu_custom_call.1} parent=1 // pred_region
      %21 = dma.done [#allocation3], 256
    $region9: #{tpu_custom_call.1} parent=1 // pred_fallthru
      _
    %p22 = scmp.eq.s32.totalorder 0, 0
    // Predicated region
    $region10: #{tpu_custom_call.1} parent=1 // pred_check
      %p23 = pneg %p22
    $region11: #{tpu_custom_call.1} parent=1 // pred_check_branch
      %25 = sbr.rel (%p23) target = $region13
    $region12: #{tpu_custom_call.1} parent=1 // pred_region
      %vm26 = vcmask 7168
      %27 = vst.msk [vmem:[%s1] sm:$0xff] %vm26, 0.0
      %28 = vst.msk [vmem:[%s2] sm:$0xff] %vm26, 0.0
    $region13: #{tpu_custom_call.1} parent=1 // pred_fallthru
      _
    %v29 = vld [vmem:[#allocation2] sm:$0xff]
    %v30 = vld [vmem:[#allocation2 + $0x8] sm:$0xff]
    %v31 = vld [vmem:[%s1] sm:$0xff]
    %v32 = vadd.f32 %v29, %v30
    %33 = vadd.xlane.f32.xlu0 %v32
    %v34 = vpop.xlane.xlu0 %33
    %v35 = vadd.f32 %v31, %v34
    %vm36 = vcmask 7168
    %37 = vst.msk [vmem:[%s1] sm:$0xff] %vm36, %v35
    %v38 = vld [vmem:[%s2] sm:$0xff]
    %v39 = vmul.f32 %v29, %v29
    %v40 = vmul.f32 %v30, %v30
    %v41 = vadd.f32 %v39, %v40
    %42 = vadd.xlane.f32.xlu0 %v41
    %v43 = vpop.xlane.xlu0 %42
    %v44 = vadd.f32 %v38, %v43
    %45 = vst.msk [vmem:[%s2] sm:$0xff] %vm36, %v44
    // Predicated region
    $region14: #{tpu_custom_call.1} parent=1 // pred_check
      _
    $region15: #{tpu_custom_call.1} parent=1 // pred_check_branch
      %47 = sbr.rel (0) target = $region17
    $region16: #{tpu_custom_call.1} parent=1 // pred_region
      _
    $region17: #{tpu_custom_call.1} parent=1 // pred_fallthru
      _
    // Predicated region
    $region18: #{tpu_custom_call.1} parent=1 // pred_check
      _
    $region19: #{tpu_custom_call.1} parent=1 // pred_check_branch
      %49 = sbr.rel (0) target = $region21
    $region20: #{tpu_custom_call.1} parent=1 // pred_region
      _
    $region21: #{tpu_custom_call.1} parent=1 // pred_fallthru
      _
    // Predicated region
    $region22: #{tpu_custom_call.1} parent=1 // pred_check
      _
    $region23: #{tpu_custom_call.1} parent=1 // pred_check_branch
      %51 = sbr.rel (0) target = $region25
    $region24: #{tpu_custom_call.1} parent=1 // pred_region
      _
    $region25: #{tpu_custom_call.1} parent=1 // pred_fallthru
      _
    // Predicated region
    $region26: #{tpu_custom_call.1} parent=1 // pred_check
      _
    $region27: #{tpu_custom_call.1} parent=1 // pred_check_branch
      %53 = sbr.rel (0) target = $region29
    $region28: #{tpu_custom_call.1} parent=1 // pred_region
      _
    $region29: #{tpu_custom_call.1} parent=1 // pred_fallthru
      _
    %54 = vsyncpa [#allocation3], 1

</llo_original>
